<compile_context>
chip_gen: v6e
topology: v6e:2x2x1
jax: 0.10.0
libtpu: 0.0.40
codegen_flags: <defaults>
</compile_context>

<pallas_src>
import functools

import jax
import jax.numpy as jnp
from jax.experimental import pallas as pl
from jax.experimental.pallas import tpu as pltpu


def _round_up(x, m):
    return (x + m - 1) // m * m


def _arp_context_kernel(fidx_ref, emb_hbm, state_ref, w_emb_ref, w_state_ref,
                        out_ref, gather_ref, sem, *, tb, n_sems):
    """One grid step = one (tb, D) batch tile.

    fidx_ref:   (b_pad,) int32 in SMEM (scalar prefetch) - flat row indices.
    emb_hbm:    (B*N, D) embedding table left in HBM (memory_space=pl.ANY).
    state_ref:  (tb, 1)  capacity - used for this tile.
    w_emb_ref:  (D, D)   VMEM-resident weight slab.
    w_state_ref:(1, D)   VMEM-resident state weight row.
    gather_ref: (tb, D)  VMEM scratch the row DMAs land in directly.
    sem:        (n_sems,) DMA semaphore ring.
    """
    base = pl.program_id(0) * tb

    def row_copy(r, slot):
        # One gathered embedding row: HBM (1, D) -> VMEM scratch row r.
        return pltpu.make_async_copy(
            emb_hbm.at[pl.ds(fidx_ref[base + r], 1), :],
            gather_ref.at[pl.ds(r, 1), :],
            sem.at[slot])

    # Keep n_sems row DMAs in flight (semaphore ring): prime / steady / drain.
    @pl.loop(0, n_sems)
    def _prime(r):
        row_copy(r, r).start()

    @pl.loop(n_sems, tb)
    def _steady(r):
        slot = r % n_sems
        row_copy(r - n_sems, slot).wait()   # free the slot
        row_copy(r, slot).start()

    @pl.loop(tb - n_sems, tb)
    def _drain(r):
        row_copy(r, r % n_sems).wait()

    # Fused projection for the whole tile: one MXU pass + f32 epilogue.
    cur = gather_ref[...]                                   # (tb, D)
    out = jnp.dot(cur, w_emb_ref[...],                      # (tb,D)@(D,D)
                  preferred_element_type=jnp.float32)
    state = state_ref[...].astype(jnp.float32)              # (tb, 1)
    out = out + state * w_state_ref[...].astype(jnp.float32)
    out_ref[...] = out.astype(out_ref.dtype)


def arp_context(embeddings, current_node, vehicle_capacity, used_capacity,
                weight_t, *, batch_tile=None):
    """Pallas implementation of ARPContext.forward.

    embeddings:       (B, N, D) float
    current_node:     (B,) or (B, 1) int
    vehicle_capacity: (B, 1) float
    used_capacity:    (B, 1) float
    weight_t:         (D + 1, D) float  (torch Linear weight, transposed)
    returns:          (B, D) float
    """
    B, N, D = embeddings.shape
    assert weight_t.shape == (D + 1, D)
    dtype = embeddings.dtype

    # Batch tile: sublane-aligned, big enough to amortize per-tile overhead,
    # but aim for >= 2 outer tiles so both v7x TensorCores get work.
    if batch_tile is None:
        if B <= 16:
            batch_tile = _round_up(B, 8)
        elif B <= 1024:
            batch_tile = _round_up(pl.cdiv(B, 2), 8)
        else:
            batch_tile = 512
    tb = batch_tile
    b_pad = _round_up(B, tb)

    # Flat row index into the (B*N, D) embedding table.
    # NOTE: clip silently remaps out-of-range indices (torch.gather would error).
    idx = jnp.clip(current_node.reshape(B).astype(jnp.int32), 0, N - 1)
    fidx = jnp.arange(B, dtype=jnp.int32) * N + idx            # (B,)
    state = (vehicle_capacity.reshape(B, 1)
             - used_capacity.reshape(B, 1)).astype(dtype)      # (B, 1)
    if b_pad != B:
        fidx = jnp.pad(fidx, (0, b_pad - B))                   # pad gathers row 0
        state = jnp.pad(state, ((0, b_pad - B), (0, 0)))

    emb2d = embeddings.reshape(B * N, D)          # contiguous view, no copy
    w_emb = weight_t[:D, :].astype(dtype)         # (D, D) match activation dtype
    w_state = weight_t[D:, :].astype(dtype)       # (1, D)

    n_tiles = b_pad // tb
    n_sems = min(8, tb)                           # row DMAs in flight per tile

    itemsize = jnp.dtype(dtype).itemsize
    cost = pl.CostEstimate(
        flops=2 * b_pad * D * D,
        transcendentals=0,
        bytes_accessed=(2 * b_pad * D + (D + 1) * D + b_pad) * itemsize)

    kernel = functools.partial(_arp_context_kernel, tb=tb, n_sems=n_sems)

    out = pl.pallas_call(
        kernel,
        out_shape=jax.ShapeDtypeStruct((b_pad, D), dtype),
        grid_spec=pltpu.PrefetchScalarGridSpec(
            num_scalar_prefetch=1,
            grid=(n_tiles,),
            in_specs=[
                # Embedding table stays in HBM; gathered row-by-row via DMA.
                pl.BlockSpec(memory_space=pl.ANY),
                # Precomputed state for this batch tile.
                pl.BlockSpec((tb, 1), lambda i, sidx: (i, 0)),
                # Weights: constant block -> VMEM-resident for all grid steps.
                pl.BlockSpec((D, D), lambda i, sidx: (0, 0)),
                pl.BlockSpec((1, D), lambda i, sidx: (0, 0)),
            ],
            out_specs=pl.BlockSpec((tb, D), lambda i, sidx: (i, 0)),
            scratch_shapes=[
                pltpu.VMEM((tb, D), dtype),           # gather landing buffer
                pltpu.SemaphoreType.DMA((n_sems,)),   # DMA semaphore ring
            ]),
        compiler_params=pltpu.CompilerParams(
            dimension_semantics=("parallel",)),
        cost_estimate=cost,
    )(fidx, emb2d, state, w_emb, w_state)

    return out[:B]


if __name__ == "__main__":
    # Small but TPU-friendly shapes: lane-dense embed_dim, sublane-aligned B.
    B, N, D = 8, 16, 128  # batch, num_nodes, embed_dim

    key = jax.random.PRNGKey(0)
    k_emb, k_idx, k_used, k_w = jax.random.split(key, 4)

    embeddings = jax.random.normal(k_emb, (B, N, D), dtype=jnp.float32)
    current_node = jax.random.randint(k_idx, (B,), 0, N, dtype=jnp.int32)
    vehicle_capacity = jnp.ones((B, 1), dtype=jnp.float32)
    used_capacity = jax.random.uniform(k_used, (B, 1), dtype=jnp.float32)

    # Deterministic init mimicking nn.Linear(D+1, D, bias=False):
    # torch weight has shape (D, D+1); we store its transpose (D+1, D).
    bound = 1.0 / jnp.sqrt(jnp.float32(D + 1))
    weight_t = jax.random.uniform(
        k_w, (D + 1, D), minval=-bound, maxval=bound, dtype=jnp.float32)

    out = arp_context(embeddings, current_node, vehicle_capacity,
                      used_capacity, weight_t)
    out = jax.block_until_ready(out)

    # Pure-JAX reference (mirrors the PyTorch forward exactly).
    cur = jnp.take_along_axis(
        embeddings, current_node[:, None, None].astype(jnp.int32), axis=1
    )[:, 0, :]                                                # (B, D)
    state = vehicle_capacity - used_capacity                  # (B, 1)
    ctx = jnp.concatenate([cur, state], axis=-1)              # (B, D+1)
    ref = ctx @ weight_t                                      # (B, D)

    assert out.shape == (B, D)
    assert jnp.allclose(out, ref, atol=1e-5, rtol=1e-5), "mismatch vs reference"
    print("KERNEL_OK")
</pallas_src>

<mosaic_0001>
module attributes {stable_mosaic.version = 11 : i64} {
  func.func @_arp_context_kernel(%arg0: i32, %arg1: memref<8xi32, #tpu.memory_space<smem>>, %arg2: memref<128x128xf32, #tpu.memory_space<any>>, %arg3: memref<8x1xf32, #tpu.memory_space<vmem>>, %arg4: memref<128x128xf32, #tpu.memory_space<vmem>>, %arg5: memref<1x128xf32, #tpu.memory_space<vmem>>, %arg6: memref<8x128xf32, #tpu.memory_space<vmem>>, %arg7: memref<8x128xf32, #tpu.memory_space<vmem>>, %arg8: memref<8x!tpu.dma_semaphore, #tpu.memory_space<semaphore_mem>>) attributes {dimension_semantics = [#tpu.dimension_semantics<parallel>], iteration_bounds = array<i64: 1>, scalar_prefetch = 1 : i64, scratch_operands = 2 : i64, tpu.core_type = #tpu.core_type<tc>, window_params = [{}, {transform_indices = @transform_1, window_bounds = array<i64: 8, 1>}, {pipeline_mode = #tpu.pipeline_mode<synchronous>, transform_indices = @transform_2, window_bounds = array<i64: 128, 128>}, {pipeline_mode = #tpu.pipeline_mode<synchronous>, transform_indices = @transform_3, window_bounds = array<i64: 1, 128>}, {transform_indices = @transform_4, window_bounds = array<i64: 8, 128>}]} {
    %c8_i32 = arith.constant 8 : i32
    %0 = arith.muli %arg0, %c8_i32 : i32
    %c0_i32 = arith.constant 0 : i32
    %c8_i32_0 = arith.constant 8 : i32
    %1 = arith.addi %c0_i32, %c8_i32_0 : i32
    %c1_i32 = arith.constant 1 : i32
    scf.for %arg9 = %c0_i32 to %1 step %c1_i32  : i32 {
      %c1_i32_19 = arith.constant 1 : i32
      %14 = arith.muli %arg9, %c1_i32_19 : i32
      %c0_i32_20 = arith.constant 0 : i32
      %15 = arith.addi %c0_i32_20, %14 : i32
      %16 = arith.addi %0, %15 : i32
      %17 = arith.index_cast %16 : i32 to index
      %18 = memref.load %arg1[%17] : memref<8xi32, #tpu.memory_space<smem>>
      %c0_i32_21 = arith.constant 0 : i32
      %19 = tpu.memref_slice %arg2[%18, %c0_i32_21] : memref<128x128xf32, #tpu.memory_space<any>> -> memref<1x128xf32, #tpu.memory_space<any>>
      %c0_i32_22 = arith.constant 0 : i32
      %20 = tpu.memref_slice %arg7[%15, %c0_i32_22] : memref<8x128xf32, #tpu.memory_space<vmem>> -> memref<1x128xf32, #tpu.memory_space<vmem>>
      %21 = tpu.memref_slice %arg8[%15] : memref<8x!tpu.dma_semaphore, #tpu.memory_space<semaphore_mem>> -> memref<1x!tpu.dma_semaphore, #tpu.memory_space<semaphore_mem>>
      %22 = tpu.memref_squeeze %21 : memref<1x!tpu.dma_semaphore, #tpu.memory_space<semaphore_mem>> -> memref<!tpu.dma_semaphore, #tpu.memory_space<semaphore_mem>>
      tpu.enqueue_dma source(%19 : memref<1x128xf32, #tpu.memory_space<any>>) target(%20 : memref<1x128xf32, #tpu.memory_space<vmem>>) target_semaphore(%22 : memref<!tpu.dma_semaphore, #tpu.memory_space<semaphore_mem>>)
    }
    %c8_i32_1 = arith.constant 8 : i32
    %c0_i32_2 = arith.constant 0 : i32
    %c0_i32_3 = arith.constant 0 : i32
    %2 = arith.addi %c0_i32_2, %c0_i32_3 : i32
    %c1_i32_4 = arith.constant 1 : i32
    scf.for %arg9 = %c0_i32_2 to %2 step %c1_i32_4  : i32 {
      %c1_i32_19 = arith.constant 1 : i32
      %14 = arith.muli %arg9, %c1_i32_19 : i32
      %c8_i32_20 = arith.constant 8 : i32
      %15 = arith.addi %c8_i32_20, %14 : i32
      %c8_i32_21 = arith.constant 8 : i32
      %c0_i32_22 = arith.constant 0 : i32
      %16 = arith.cmpi eq, %c8_i32_21, %c0_i32_22 : i32
      %c1_i32_23 = arith.constant 1 : i32
      %17 = arith.select %16, %c1_i32_23, %c8_i32_21 : i32
      %18 = arith.remsi %15, %17 : i32
      %c0_i32_24 = arith.constant 0 : i32
      %19 = arith.cmpi ne, %18, %c0_i32_24 : i32
      %c0_i32_25 = arith.constant 0 : i32
      %20 = arith.cmpi slt, %18, %c0_i32_25 : i32
      %c0_i32_26 = arith.constant 0 : i32
      %21 = arith.cmpi slt, %17, %c0_i32_26 : i32
      %22 = arith.xori %20, %21 : i1
      %23 = arith.andi %22, %19 : i1
      %24 = arith.addi %18, %17 : i32
      %25 = arith.select %23, %24, %18 : i32
      %c8_i32_27 = arith.constant 8 : i32
      %26 = arith.subi %15, %c8_i32_27 : i32
      %27 = arith.addi %0, %26 : i32
      %28 = arith.index_cast %27 : i32 to index
      %29 = memref.load %arg1[%28] : memref<8xi32, #tpu.memory_space<smem>>
      %c0_i32_28 = arith.constant 0 : i32
      %30 = tpu.memref_slice %arg2[%29, %c0_i32_28] : memref<128x128xf32, #tpu.memory_space<any>> -> memref<1x128xf32, #tpu.memory_space<any>>
      %c0_i32_29 = arith.constant 0 : i32
      %31 = tpu.memref_slice %arg7[%26, %c0_i32_29] : memref<8x128xf32, #tpu.memory_space<vmem>> -> memref<1x128xf32, #tpu.memory_space<vmem>>
      %32 = tpu.memref_slice %arg8[%25] : memref<8x!tpu.dma_semaphore, #tpu.memory_space<semaphore_mem>> -> memref<1x!tpu.dma_semaphore, #tpu.memory_space<semaphore_mem>>
      %33 = tpu.memref_squeeze %32 : memref<1x!tpu.dma_semaphore, #tpu.memory_space<semaphore_mem>> -> memref<!tpu.dma_semaphore, #tpu.memory_space<semaphore_mem>>
      tpu.wait_dma2 semaphore(%33 : memref<!tpu.dma_semaphore, #tpu.memory_space<semaphore_mem>>) src(%30 : memref<1x128xf32, #tpu.memory_space<any>>) dst(%31 : memref<1x128xf32, #tpu.memory_space<vmem>>)
      %34 = arith.addi %0, %15 : i32
      %35 = arith.index_cast %34 : i32 to index
      %36 = memref.load %arg1[%35] : memref<8xi32, #tpu.memory_space<smem>>
      %c0_i32_30 = arith.constant 0 : i32
      %37 = tpu.memref_slice %arg2[%36, %c0_i32_30] : memref<128x128xf32, #tpu.memory_space<any>> -> memref<1x128xf32, #tpu.memory_space<any>>
      %c0_i32_31 = arith.constant 0 : i32
      %38 = tpu.memref_slice %arg7[%15, %c0_i32_31] : memref<8x128xf32, #tpu.memory_space<vmem>> -> memref<1x128xf32, #tpu.memory_space<vmem>>
      %39 = tpu.memref_slice %arg8[%25] : memref<8x!tpu.dma_semaphore, #tpu.memory_space<semaphore_mem>> -> memref<1x!tpu.dma_semaphore, #tpu.memory_space<semaphore_mem>>
      %40 = tpu.memref_squeeze %39 : memref<1x!tpu.dma_semaphore, #tpu.memory_space<semaphore_mem>> -> memref<!tpu.dma_semaphore, #tpu.memory_space<semaphore_mem>>
      tpu.enqueue_dma source(%37 : memref<1x128xf32, #tpu.memory_space<any>>) target(%38 : memref<1x128xf32, #tpu.memory_space<vmem>>) target_semaphore(%40 : memref<!tpu.dma_semaphore, #tpu.memory_space<semaphore_mem>>)
    }
    %c0_i32_5 = arith.constant 0 : i32
    %c0_i32_6 = arith.constant 0 : i32
    %c8_i32_7 = arith.constant 8 : i32
    %3 = arith.addi %c0_i32_6, %c8_i32_7 : i32
    %c1_i32_8 = arith.constant 1 : i32
    scf.for %arg9 = %c0_i32_6 to %3 step %c1_i32_8  : i32 {
      %c1_i32_19 = arith.constant 1 : i32
      %14 = arith.muli %arg9, %c1_i32_19 : i32
      %c0_i32_20 = arith.constant 0 : i32
      %15 = arith.addi %c0_i32_20, %14 : i32
      %c8_i32_21 = arith.constant 8 : i32
      %c0_i32_22 = arith.constant 0 : i32
      %16 = arith.cmpi eq, %c8_i32_21, %c0_i32_22 : i32
      %c1_i32_23 = arith.constant 1 : i32
      %17 = arith.select %16, %c1_i32_23, %c8_i32_21 : i32
      %18 = arith.remsi %15, %17 : i32
      %c0_i32_24 = arith.constant 0 : i32
      %19 = arith.cmpi ne, %18, %c0_i32_24 : i32
      %c0_i32_25 = arith.constant 0 : i32
      %20 = arith.cmpi slt, %18, %c0_i32_25 : i32
      %c0_i32_26 = arith.constant 0 : i32
      %21 = arith.cmpi slt, %17, %c0_i32_26 : i32
      %22 = arith.xori %20, %21 : i1
      %23 = arith.andi %22, %19 : i1
      %24 = arith.addi %18, %17 : i32
      %25 = arith.select %23, %24, %18 : i32
      %26 = arith.addi %0, %15 : i32
      %27 = arith.index_cast %26 : i32 to index
      %28 = memref.load %arg1[%27] : memref<8xi32, #tpu.memory_space<smem>>
      %c0_i32_27 = arith.constant 0 : i32
      %29 = tpu.memref_slice %arg2[%28, %c0_i32_27] : memref<128x128xf32, #tpu.memory_space<any>> -> memref<1x128xf32, #tpu.memory_space<any>>
      %c0_i32_28 = arith.constant 0 : i32
      %30 = tpu.memref_slice %arg7[%15, %c0_i32_28] : memref<8x128xf32, #tpu.memory_space<vmem>> -> memref<1x128xf32, #tpu.memory_space<vmem>>
      %31 = tpu.memref_slice %arg8[%25] : memref<8x!tpu.dma_semaphore, #tpu.memory_space<semaphore_mem>> -> memref<1x!tpu.dma_semaphore, #tpu.memory_space<semaphore_mem>>
      %32 = tpu.memref_squeeze %31 : memref<1x!tpu.dma_semaphore, #tpu.memory_space<semaphore_mem>> -> memref<!tpu.dma_semaphore, #tpu.memory_space<semaphore_mem>>
      tpu.wait_dma2 semaphore(%32 : memref<!tpu.dma_semaphore, #tpu.memory_space<semaphore_mem>>) src(%29 : memref<1x128xf32, #tpu.memory_space<any>>) dst(%30 : memref<1x128xf32, #tpu.memory_space<vmem>>)
    }
    %c8_i32_9 = arith.constant 8 : i32
    %c0 = arith.constant 0 : index
    %c0_10 = arith.constant 0 : index
    %4 = vector.load %arg7[%c0, %c0_10] : memref<8x128xf32, #tpu.memory_space<vmem>>, vector<8x128xf32>
    %c0_11 = arith.constant 0 : index
    %c0_12 = arith.constant 0 : index
    %5 = vector.load %arg4[%c0_11, %c0_12] : memref<128x128xf32, #tpu.memory_space<vmem>>, vector<128x128xf32>
    %cst = arith.constant dense<0.000000e+00> : vector<8x128xf32>
    %6 = tpu.matmul %4, %5, %cst {dimension_numbers = #tpu.dot_dimension_numbers<[1], [0], [0], [1], [0, 0, 1, 1], [], []>} : vector<8x128xf32>, vector<128x128xf32>, vector<8x128xf32> -> vector<8x128xf32>
    %c0_13 = arith.constant 0 : index
    %c0_14 = arith.constant 0 : index
    %7 = vector.load %arg3[%c0_13, %c0_14] : memref<8x1xf32, #tpu.memory_space<vmem>>, vector<8x1xf32>
    %c0_15 = arith.constant 0 : index
    %c0_16 = arith.constant 0 : index
    %8 = vector.load %arg5[%c0_15, %c0_16] : memref<1x128xf32, #tpu.memory_space<vmem>>, vector<1x128xf32>
    %9 = vector.broadcast %7 : vector<8x1xf32> to vector<8x128xf32>
    %10 = vector.broadcast %8 : vector<1x128xf32> to vector<8x128xf32>
    %11 = arith.mulf %9, %10 : vector<8x128xf32>
    %12 = arith.addf %6, %11 : vector<8x128xf32>
    %c0_17 = arith.constant 0 : index
    %c0_18 = arith.constant 0 : index
    %13 = vector.load %arg6[%c0_17, %c0_18] : memref<8x128xf32, #tpu.memory_space<vmem>>, vector<8x128xf32>
    tpu.vector_store %arg6[%c0_17, %c0_18], %12 {strides = array<i32>} : memref<8x128xf32, #tpu.memory_space<vmem>>, vector<8x128xf32>,
    return
  }
  func.func @transform_1(%arg0: i32, %arg1: memref<8xi32, #tpu.memory_space<smem>>) -> (i32, i32) {
    %c0_i32 = arith.constant 0 : i32
    %c0_i32_0 = arith.constant 0 : i32
    return %arg0, %c0_i32 : i32, i32
  }
  func.func @transform_2(%arg0: i32, %arg1: memref<8xi32, #tpu.memory_space<smem>>) -> (i32, i32) {
    %c0_i32 = arith.constant 0 : i32
    %c0_i32_0 = arith.constant 0 : i32
    %c0_i32_1 = arith.constant 0 : i32
    return %c0_i32, %c0_i32_0 : i32, i32
  }
  func.func @transform_3(%arg0: i32, %arg1: memref<8xi32, #tpu.memory_space<smem>>) -> (i32, i32) {
    %c0_i32 = arith.constant 0 : i32
    %c0_i32_0 = arith.constant 0 : i32
    %c0_i32_1 = arith.constant 0 : i32
    return %c0_i32, %c0_i32_0 : i32, i32
  }
  func.func @transform_4(%arg0: i32, %arg1: memref<8xi32, #tpu.memory_space<smem>>) -> (i32, i32) {
    %c0_i32 = arith.constant 0 : i32
    %c0_i32_0 = arith.constant 0 : i32
    return %arg0, %c0_i32 : i32, i32
  }
}

</mosaic_0001>

<llo_original>
// kernel: tpu_custom_call.1
$region0: #{tpu_custom_call.1}
  #allocation0 [shape = 'u32[]', space=smem, size = 0x4, offset = 0x4, fixed_abs, tag = 'smem constant byte address 0x4 - core index']
  #allocation1 [shape = 'u32[144,128]{1,0:T(1,128)}', space=vmem, size = 0x12000, scoped, tag = 'internal scratch']
  #allocation2 [shape = 'f32[8,128]{1,0:T(8,128)}', space=vmem, size = 0x1000, scoped, tag = 'scratch operand']
  #allocation3 [shape = 's32[8]{0}', space=sflag, size = 0x20, scoped, tag = 'scratch operand']
  #allocation4 [shape = 's32[1]{0}', space=sflag, size = 0x4, scoped, tag = 'scoped memory for tpu_custom_call.1']
  #allocation5 [shape = 'u8[512]{0}', space=smem, size = 0x200, scoped, tag = 'prefetched SMEM operand 0']
  #allocation10 [shape = 's32[]', space=sflag, size = 0x4, offset = 0, fixed_abs, tag = 'sflag constant byte address 0x0 - dummy sync flag']
  #allocation11 [shape = 's32[]', space=sflag, size = 0x4, offset = 0, fixed_abs, tag = 'sflag constant byte address 0x0 - dummy sync flag']
  #allocation12 [shape = 'u32[]', space=smem, size = 0x4, offset = 0x44, fixed_abs, tag = 'smem constant byte address 0x44 - assertion arg 0']
  #allocation13 [shape = 'u32[]', space=smem, size = 0x4, offset = 0x48, fixed_abs, tag = 'smem constant byte address 0x48 - assertion arg 1']
  %s0 = inlined_call_operand.vmem [shape: s32[8], index: 0, kind: input, shape index: {}]
  %s1 = inlined_call_operand.hbm [shape: f32[128,128], index: 1, kind: input, shape index: {}]
  %s2 = inlined_call_operand.vmem [shape: f32[8,1], index: 2, kind: input, shape index: {}]
  %s3 = inlined_call_operand.hbm [shape: f32[128,128], index: 3, kind: input, shape index: {}]
  %s4 = inlined_call_operand.vmem [shape: f32[1,128], index: 4, kind: input, shape index: {}]
  %s5 = inlined_call_operand.hbm [shape: f32[8,128], index: 5, kind: output, shape index: {}]
  %s6 = sld [smem:[#allocation0]]
  $region44: #{tpu_custom_call.1} parent=0
    _
  %s8 = ssub.s32 1, %s6
  %s9 = scalar_select 0, %s8, %s6
  %s10 = sshll.u32 %s0, 4
  %s11 = int_to_ptr.vmem [resolvable:$true] %s10
  %13 = dma.vmem_to_smem %s11, 16, [#allocation5], [#allocation4]
  %14 = dma.done [#allocation4], 16
  %15 = sfence
  $region1: #{tpu_custom_call.1} parent=0
    #allocation6 [shape = 'u8[65536]{0}', space=vmem, size = 0x10000, scoped, tag = 'input window, operand 3, single buffered']
    #allocation7 [shape = 's32[1]{0}', space=sflag, size = 0x4, scoped, tag = 'scoped memory for tpu_custom_call.1']
    #allocation8 [shape = 's32[1]{0}', space=sflag, size = 0x4, scoped, tag = 'scoped memory for tpu_custom_call.1']
    #allocation9 [shape = 'u8[4096]{0}', space=vmem, size = 0x1000, scoped, tag = 'output window, operand 0, single buffered']
    %16 = vsyncpa [#allocation7], 0
    %17 = vsyncpa [#allocation8], 0
    // Predicated region
    $region2: #{tpu_custom_call.1} parent=1 // pred_check
      _
    $region3: #{tpu_custom_call.1} parent=1 // pred_check_branch
      %19 = sbr.rel (0) target = $region5
    $region4: #{tpu_custom_call.1} parent=1 // pred_region
      _
    $region5: #{tpu_custom_call.1} parent=1 // pred_fallthru
      _
    // Predicated region
    $region6: #{tpu_custom_call.1} parent=1 // pred_check
      _
    $region7: #{tpu_custom_call.1} parent=1 // pred_check_branch
      %21 = sbr.rel (0) target = $region9
    $region8: #{tpu_custom_call.1} parent=1 // pred_region
      %s23 = ssub.s32 2048, 2048
      %24 = vsyncadd [#allocation7], %s23
      %s25 = sshll.u32 [#allocation6], 4
      %s26 = int_to_ptr.vmem [resolvable:$true] %s25
      %31 = dma.hbm_to_vmem [thread:$0]  %s3, 2048, %s26, [#allocation7], 128, 128, 8
    $region9: #{tpu_custom_call.1} parent=1 // pred_fallthru
      _
    // Predicated region
    $region10: #{tpu_custom_call.1} parent=1 // pred_check
      _
    $region11: #{tpu_custom_call.1} parent=1 // pred_check_branch
      %33 = sbr.rel (0) target = $region13
    $region12: #{tpu_custom_call.1} parent=1 // pred_region
      _
    $region13: #{tpu_custom_call.1} parent=1 // pred_fallthru
      _
    // Predicated region
    $region14: #{tpu_custom_call.1} parent=1 // pred_check
      _
    $region15: #{tpu_custom_call.1} parent=1 // pred_check_branch
      %35 = sbr.rel (0) target = $region17
    $region16: #{tpu_custom_call.1} parent=1 // pred_region
      %36 = dma.done [#allocation7], 2048
    $region17: #{tpu_custom_call.1} parent=1 // pred_fallthru
      _
    %s37 = smul.u32 0, 8
    loop: start=0, step=1, limit=8
    $region18: #{tpu_custom_call.1} parent=1 // loop_pre_header
      _
    $region19: #{tpu_custom_call.1} parent=1 // loop_header
      %s39 = sphi 0, %s43
      %p40 = scmp.ge.s32.totalorder %s39, 8
    $region20: #{tpu_custom_call.1} parent=1 // loop_header_branch
      %42 = sbr.rel (%p40) target = $region24
    $region21: #{tpu_custom_call.1} parent=1 // loop_body
      %s44 = sadd.s32 %s37, %s39
      %s45 = sld [smem:[#allocation5 + %s44]]
      %s46 = smul.addr %s45, 16
      %s47 = scalar_lea.hbm %s1, %s46
      %s48 = scalar_lea.vmem [#allocation2], %s39
      %s49 = scalar_lea.sflag [#allocation3], %s39
      // Predicated region
      $region25: #{tpu_custom_call.1} parent=21 // pred_check
        _
      $region26: #{tpu_custom_call.1} parent=21 // pred_check_branch
        %51 = sbr.rel target = $region28
      $region27: #{tpu_custom_call.1} parent=21 // pred_region
        %52 = sst [smem:[#allocation12]] [#allocation11]
        %53 = sst [smem:[#allocation13]] [#allocation10]
      $region28: #{tpu_custom_call.1} parent=21 // pred_fallthru
        _
      %55 = shalt.err (0)
      %s57 = sshll.u32 %s48, 4
      %s58 = int_to_ptr.vmem [resolvable:$true] %s57
      %60 = dma.hbm_to_vmem [thread:$0]  %s47, 16, %s58, %s49
    $region22: #{tpu_custom_call.1} parent=1 // loop_footer
      %s43 = sadd.s32 1, %s39
    $region23: #{tpu_custom_call.1} parent=1 // loop_footer_branch
      %38 = sbr.rel target = $region19
    $region24: #{tpu_custom_call.1} parent=1 // loop_exit
      _
    loop: start=0, step=1, limit=8
    $region29: #{tpu_custom_call.1} parent=1 // loop_pre_header
      _
    $region30: #{tpu_custom_call.1} parent=1 // loop_header
      %s62 = sphi 0, %s66
      %p63 = scmp.ge.s32.totalorder %s62, 8
    $region31: #{tpu_custom_call.1} parent=1 // loop_header_branch
      %65 = sbr.rel (%p63) target = $region35
    $region32: #{tpu_custom_call.1} parent=1 // loop_body
      %p67 = scmp.lt.s32.totalorder %s62, 0
      %s68 = ssub.s32 0, %s62
      %s69 = scalar_select %p67, %s68, %s62
      %s70 = sand.u32 %s69, 7
      %s71 = ssub.s32 0, %s70
      %s72 = scalar_select %p67, %s71, %s70
      %p73 = scmp.ne.s32.totalorder %s72, 0
      %p74 = scmp.lt.s32.totalorder %s72, 0
      %p75 = pnand %p74, %p73
      %p76 = pneg %p75
      %s77 = sadd.s32 %s72, 8
      %s78 = scalar_select %p76, %s77, %s72
      %s79 = sadd.s32 %s37, %s62
      %s80 = sld [smem:[#allocation5 + %s79]]
      %s81 = scalar_lea.sflag [#allocation3], %s78
      %s82 = smul.u32 1, 1
      %s83 = sshll.u32 %s82, 4
      %84 = dma.done %s81, %s83
    $region33: #{tpu_custom_call.1} parent=1 // loop_footer
      %s66 = sadd.s32 1, %s62
    $region34: #{tpu_custom_call.1} parent=1 // loop_footer_branch
      %61 = sbr.rel target = $region30
    $region35: #{tpu_custom_call.1} parent=1 // loop_exit
      _
    %v85 = vld [vmem:[#allocation2] sm:$0xff]
    %v86 = vld [vmem:[#allocation6] sm:$0xff]
    %v87 = vld [vmem:[#allocation6 + $0x8] sm:$0xff]
    %v88 = vld [vmem:[#allocation6 + $0x10] sm:$0xff]
    %v89 = vld [vmem:[#allocation6 + $0x18] sm:$0xff]
    %v90 = vld [vmem:[#allocation6 + $0x20] sm:$0xff]
    %v91 = vld [vmem:[#allocation6 + $0x28] sm:$0xff]
    %v92 = vld [vmem:[#allocation6 + $0x30] sm:$0xff]
    %v93 = vld [vmem:[#allocation6 + $0x38] sm:$0xff]
    %v94 = vld [vmem:[#allocation6 + $0x40] sm:$0xff]
    %v95 = vld [vmem:[#allocation6 + $0x48] sm:$0xff]
    %v96 = vld [vmem:[#allocation6 + $0x50] sm:$0xff]
    %v97 = vld [vmem:[#allocation6 + $0x58] sm:$0xff]
    %v98 = vld [vmem:[#allocation6 + $0x60] sm:$0xff]
    %v99 = vld [vmem:[#allocation6 + $0x68] sm:$0xff]
    %v100 = vld [vmem:[#allocation6 + $0x70] sm:$0xff]
    %v101 = vld [vmem:[#allocation6 + $0x78] sm:$0xff]
    %v102 = vld [vmem:[%s2] sm:$0xff]
    %v103 = vld [vmem:[%s4] sm:$0x1]
    %105 = vset.pattern.permute.xlu0 0
    %106 = vperm.xlu0 %105, %v102
    %v107 = vpop.permute.xlu0 %106
    %v110 = vlaneseq
    %v111 = vshrl.u32 %v110, 7
    %v112 = vsub.s32 0, %v111
    %v113 = vrot.slane %v103, %v112
    %v115 = vmul.f32 %v107, %v113
    %116 = vmatprep.subr.mxu0 0.0
    %117 = vmatpush1.msra.mxu0 %v101
    %118 = vmatprep.subr.mxu0 0.0
    %119 = vmatpush1.msra.mxu0 %v100
    %120 = vmatprep.subr.mxu0 0.0
    %121 = vmatpush1.msra.mxu0 %v99
    %122 = vmatprep.subr.mxu0 0.0
    %123 = vmatpush1.msra.mxu0 %v98
    %124 = vmatprep.subr.mxu0 0.0
    %125 = vmatpush1.msra.mxu0 %v97
    %126 = vmatprep.subr.mxu0 0.0
    %127 = vmatpush1.msra.mxu0 %v96
    %128 = vmatprep.subr.mxu0 0.0
    %129 = vmatpush1.msra.mxu0 %v95
    %130 = vmatprep.subr.mxu0 0.0
    %131 = vmatpush1.msra.mxu0 %v94
    %132 = vmatprep.subr.mxu0 0.0
    %133 = vmatpush1.msra.mxu0 %v93
    %134 = vmatprep.subr.mxu0 0.0
    %135 = vmatpush1.msra.mxu0 %v92
    %136 = vmatprep.subr.mxu0 0.0
    %137 = vmatpush1.msra.mxu0 %v91
    %138 = vmatprep.subr.mxu0 0.0
    %139 = vmatpush1.msra.mxu0 %v90
    %140 = vmatprep.subr.mxu0 0.0
    %141 = vmatpush1.msra.mxu0 %v89
    %142 = vmatprep.subr.mxu0 0.0
    %143 = vmatpush1.msra.mxu0 %v88
    %144 = vmatprep.subr.mxu0 0.0
    %145 = vmatpush1.msra.mxu0 %v87
    %146 = vmatprep.subr.mxu0 0.0
    %147 = vmatpush1.msra.mxu0 %v86
    %148 = vmatprep.subr.mxu0 0.0
    %149 = vmatpush2.msra.mxu0 0.0
    %150 = vmatprep.subr.mxu0 0.0
    %151 = vmatpush2.msra.mxu0 0.0
    %152 = vmatprep.subr.mxu0 0.0
    %153 = vmatpush2.msra.mxu0 0.0
    %154 = vmatprep.subr.mxu0 0.0
    %155 = vmatpush2.msra.mxu0 0.0
    %156 = vmatprep.subr.mxu0 0.0
    %157 = vmatpush2.msra.mxu0 0.0
    %158 = vmatprep.subr.mxu0 0.0
    %159 = vmatpush2.msra.mxu0 0.0
    %160 = vmatprep.subr.mxu0 0.0
    %161 = vmatpush2.msra.mxu0 0.0
    %162 = vmatprep.subr.mxu0 0.0
    %163 = vmatpush2.msra.mxu0 0.0
    %164 = vmatprep.subr.mxu0 0.0
    %165 = vmatpush2.msra.mxu0 0.0
    %166 = vmatprep.subr.mxu0 0.0
    %167 = vmatpush2.msra.mxu0 0.0
    %168 = vmatprep.subr.mxu0 0.0
    %169 = vmatpush2.msra.mxu0 0.0
    %170 = vmatprep.subr.mxu0 0.0
    %171 = vmatpush2.msra.mxu0 0.0
    %172 = vmatprep.subr.mxu0 0.0
    %173 = vmatpush2.msra.mxu0 0.0
    %174 = vmatprep.subr.mxu0 0.0
    %175 = vmatpush2.msra.mxu0 0.0
    %176 = vmatprep.subr.mxu0 0.0
    %177 = vmatpush2.msra.mxu0 0.0
    %178 = vmatprep.subr.mxu0 0.0
    %179 = vmatpush2.msra.mxu0 0.0
    %180 = vmatprep.mubr.f32.mxu0 0.0
    %181 = vmatmul.mubr.f32.gmra.mxu0 %v85
    %v182 = vpop.f32.mrf.mxu0
    %v183 = vadd.f32 %v115, %v182
    %v184 = vpop.f32.mrf.mxu0
    %185 = vdwg.mxu0
    %186 = vst [vmem:[#allocation9] sm:$0xff] %v183
    // Predicated region
    $region36: #{tpu_custom_call.1} parent=1 // pred_check
      _
    $region37: #{tpu_custom_call.1} parent=1 // pred_check_branch
      %188 = sbr.rel (0) target = $region39
    $region38: #{tpu_custom_call.1} parent=1 // pred_region
      %s190 = ssub.s32 128, 128
      %191 = vsyncadd [#allocation8], %s190
      %s193 = sshll.u32 [#allocation9], 4
      %s194 = int_to_ptr.vmem [resolvable:$true] %s193
      %196 = dma.vmem_to_hbm [thread:$0]  %s194, 128, %s5, [#allocation8]
    $region39: #{tpu_custom_call.1} parent=1 // pred_fallthru
      _
    // Predicated region
    $region40: #{tpu_custom_call.1} parent=1 // pred_check
      _
    $region41: #{tpu_custom_call.1} parent=1 // pred_check_branch
      %198 = sbr.rel (0) target = $region43
    $region42: #{tpu_custom_call.1} parent=1 // pred_region
      %199 = dma.done [#allocation8], 128
    $region43: #{tpu_custom_call.1} parent=1 // pred_fallthru
      _
    %200 = vsyncpa [#allocation7], 1
    %201 = vsyncpa [#allocation8], 1
  %202 = vsyncmov [#allocation3]
  %s203 = vpop.sfrf %202
  %p204 = scmp.eq.s32.totalorder %s203, 0
  %p205 = pneg %p204
  %207 = shalt.err (%p205)
  %s208 = scalar_lea.sflag [#allocation3], 1
  %209 = vsyncmov %s208
  %s210 = vpop.sfrf %209
  %p211 = scmp.eq.s32.totalorder %s210, 0
  %p212 = pneg %p211
  %214 = shalt.err (%p212)
  %s215 = scalar_lea.sflag [#allocation3], 2
  %216 = vsyncmov %s215
  %s217 = vpop.sfrf %216
  %p218 = scmp.eq.s32.totalorder %s217, 0
  %p219 = pneg %p218
  %221 = shalt.err (%p219)
  %s222 = scalar_lea.sflag [#allocation3], 3
  %223 = vsyncmov %s222
  %s224 = vpop.sfrf %223
  %p225 = scmp.eq.s32.totalorder %s224, 0
  %p226 = pneg %p225
  %228 = shalt.err (%p226)
  %s229 = scalar_lea.sflag [#allocation3], 4
  %230 = vsyncmov %s229
  %s231 = vpop.sfrf %230
  %p232 = scmp.eq.s32.totalorder %s231, 0
  %p233 = pneg %p232
  %235 = shalt.err (%p233)
  %s236 = scalar_lea.sflag [#allocation3], 5
  %237 = vsyncmov %s236
  %s238 = vpop.sfrf %237
  %p239 = scmp.eq.s32.totalorder %s238, 0
  %p240 = pneg %p239
  %242 = shalt.err (%p240)
  %s243 = scalar_lea.sflag [#allocation3], 6
  %244 = vsyncmov %s243
  %s245 = vpop.sfrf %244
  %p246 = scmp.eq.s32.totalorder %s245, 0
  %p247 = pneg %p246
  %249 = shalt.err (%p247)
  %s250 = scalar_lea.sflag [#allocation3], 7
  %251 = vsyncmov %s250
  %s252 = vpop.sfrf %251
  %p253 = scmp.eq.s32.totalorder %s252, 0
  %p254 = pneg %p253
  %256 = shalt.err (%p254)

</llo_original>
